<compile_context>
chip_gen: v7x
topology: tpu7x:2x2x1
jax: 0.10.0
libtpu: 0.0.40
codegen_flags: <defaults>
</compile_context>

<pallas_src>
import jax
import jax.numpy as jnp
from jax.experimental import pallas as pl
from jax.experimental.pallas import tpu as pltpu


def qnet_kernel(x_ref, w1_ref, b1_ref, w2_ref, b2_ref, out_ref):
    # Cast x to the MXU operand dtype in-kernel (wrapper ships raw f32 rows).
    x = x_ref[...].astype(w1_ref.dtype)
    # hidden = relu(x @ W1 + b1)   (f32 accumulate / bias / relu)
    h = jnp.dot(x, w1_ref[...], preferred_element_type=jnp.float32)
    h = jnp.maximum(h + b1_ref[...], 0.0)
    # out = hidden @ W2 + b2
    o = jnp.dot(h.astype(w2_ref.dtype), w2_ref[...],
                preferred_element_type=jnp.float32)
    out_ref[...] = (o + b2_ref[...]).astype(out_ref.dtype)
    # TODO(synk): if profiling ever shows the single vst slot binding at very
    # large tile_b, split the batch tile with lax.fori_loop(unroll=True) so
    # each sub-block's hidden stays vreg-resident between the two dots.


def _round_up(n, m):
    return ((n + m - 1) // m) * m


def _pick_tile_b(B):
    """Batch tile: multiple of 8 (f32 sublane); single step for small B,
    otherwise >=2 steps (megacore) capped at 1024 rows/step."""
    if B <= 256:
        return _round_up(B, 8)
    return min(1024, _round_up(pl.cdiv(B, 2), 8))


def prepare_params(w1, b1, w2, b2, compute_dtype=jnp.bfloat16):
    """Pad the hidden dim to a multiple of 128 and cast weights ONCE.

    w1: (in, hid), b1: (1, hid), w2: (hid, out), b2: (1, out)  (pre-transposed
    (in, out) layout so the kernel is plain x @ W + b on the MXU).
    Zero padding of the hidden dim is exact for matmul + bias + ReLU.
    """
    in_f, hid = w1.shape
    out_f = w2.shape[1]
    hid_p = _round_up(hid, 128)

    w1p = jnp.zeros((in_f, hid_p), compute_dtype).at[:, :hid].set(
        w1.astype(compute_dtype))
    b1p = jnp.zeros((1, hid_p), jnp.float32).at[:, :hid].set(
        b1.astype(jnp.float32))
    w2p = jnp.zeros((hid_p, out_f), compute_dtype).at[:hid, :].set(
        w2.astype(compute_dtype))
    b2p = b2.astype(jnp.float32).reshape(1, out_f)
    return w1p, b1p, w2p, b2p


def qnet_forward(x, params, *, tile_b=None, min_pallas_batch=0):
    """x: (B, in_f) float32; params from prepare_params(). Returns (B, out_f) f32."""
    w1p, b1p, w2p, b2p = params
    B, in_f = x.shape
    hid_p = w1p.shape[1]
    out_f = w2p.shape[1]

    if B < min_pallas_batch:
        # Tiny-batch fast path: XLA-fused matmuls beat pallas_call launch cost.
        h = jnp.maximum(
            jnp.dot(x.astype(w1p.dtype), w1p,
                    preferred_element_type=jnp.float32) + b1p, 0.0)
        return (jnp.dot(h.astype(w2p.dtype), w2p,
                        preferred_element_type=jnp.float32) + b2p)

    if tile_b is None:
        tile_b = _pick_tile_b(B)
    grid = (pl.cdiv(B, tile_b),)

    return pl.pallas_call(
        qnet_kernel,
        out_shape=jax.ShapeDtypeStruct((B, out_f), jnp.float32),
        grid=grid,
        in_specs=[
            # x: tiled along batch, unpadded feature width (last dim == full
            # array dim), pipelined/double-buffered by Pallas.
            pl.BlockSpec((tile_b, in_f), lambda i: (i, 0)),
            # Weights / biases: same block every step -> loaded once, VMEM-resident.
            pl.BlockSpec((in_f, hid_p), lambda i: (0, 0)),
            pl.BlockSpec((1, hid_p), lambda i: (0, 0)),
            pl.BlockSpec((hid_p, out_f), lambda i: (0, 0)),
            pl.BlockSpec((1, out_f), lambda i: (0, 0)),
        ],
        # True-width output block: ragged/partial rows on the last grid step
        # are masked by Pallas; no padded writeback.
        out_specs=pl.BlockSpec((tile_b, out_f), lambda i: (i, 0)),
        compiler_params=pltpu.CompilerParams(
            # Batch axis is embarrassingly parallel -> megacore split on v7x.
            dimension_semantics=("parallel",),
        ),
    )(x, w1p, b1p, w2p, b2p)


def init_params(key, input_size, hidden_size, output_size):
    # Mimics PyTorch's uniform(-1/sqrt(fan_in), 1/sqrt(fan_in)) init.
    k1, k2, k3, k4 = jax.random.split(key, 4)
    bound1 = 1.0 / (input_size ** 0.5)
    bound2 = 1.0 / (hidden_size ** 0.5)
    w1 = jax.random.uniform(k1, (input_size, hidden_size), jnp.float32, -bound1, bound1)
    b1 = jax.random.uniform(k2, (1, hidden_size), jnp.float32, -bound1, bound1)
    w2 = jax.random.uniform(k3, (hidden_size, output_size), jnp.float32, -bound2, bound2)
    b2 = jax.random.uniform(k4, (1, output_size), jnp.float32, -bound2, bound2)
    return w1, b1, w2, b2


if __name__ == "__main__":
    key = jax.random.PRNGKey(0)
    kx, kp = jax.random.split(key)

    # Toy Q-network shapes: state=16, hidden=32, actions=4, batch=8.
    batch, input_size, hidden_size, output_size = 8, 16, 32, 4
    x = jax.random.normal(kx, (batch, input_size), jnp.float32)
    w1, b1, w2, b2 = init_params(kp, input_size, hidden_size, output_size)

    # Pad + cast the weights ONCE (not per forward call).
    params = prepare_params(w1, b1, w2, b2)

    fwd = jax.jit(qnet_forward)
    out = jax.block_until_ready(fwd(x, params))

    # Pure-JAX f32 reference; tolerance reflects bf16 MXU operands
    # (accumulation is f32, so error is a few 1e-3 at these magnitudes).
    ref = jnp.maximum(x @ w1 + b1, 0.0) @ w2 + b2
    assert out.shape == (batch, output_size)
    assert jnp.allclose(out, ref, atol=2e-2, rtol=2e-2), (
        float(jnp.max(jnp.abs(out - ref))))

    print("KERNEL_OK")
</pallas_src>

<mosaic_0001>
module attributes {stable_mosaic.version = 11 : i64} {
  func.func @qnet_kernel(%arg0: i32, %arg1: memref<8x16xf32, #tpu.memory_space<vmem>>, %arg2: memref<16x128xbf16, #tpu.memory_space<vmem>>, %arg3: memref<1x128xf32, #tpu.memory_space<vmem>>, %arg4: memref<128x4xbf16, #tpu.memory_space<vmem>>, %arg5: memref<1x4xf32, #tpu.memory_space<vmem>>, %arg6: memref<8x4xf32, #tpu.memory_space<vmem>>) attributes {dimension_semantics = [#tpu.dimension_semantics<parallel>], iteration_bounds = array<i64: 1>, scalar_prefetch = 0 : i64, scratch_operands = 0 : i64, tpu.core_type = #tpu.core_type<tc>, window_params = [{transform_indices = @transform_0, window_bounds = array<i64: 8, 16>}, {pipeline_mode = #tpu.pipeline_mode<synchronous>, transform_indices = @transform_1, window_bounds = array<i64: 16, 128>}, {pipeline_mode = #tpu.pipeline_mode<synchronous>, transform_indices = @transform_2, window_bounds = array<i64: 1, 128>}, {pipeline_mode = #tpu.pipeline_mode<synchronous>, transform_indices = @transform_3, window_bounds = array<i64: 128, 4>}, {pipeline_mode = #tpu.pipeline_mode<synchronous>, transform_indices = @transform_4, window_bounds = array<i64: 1, 4>}, {transform_indices = @transform_5, window_bounds = array<i64: 8, 4>}]} {
    %c0 = arith.constant 0 : index
    %c0_0 = arith.constant 0 : index
    %0 = vector.load %arg1[%c0, %c0_0] : memref<8x16xf32, #tpu.memory_space<vmem>>, vector<8x16xf32>
    %1 = arith.truncf %0 : vector<8x16xf32> to vector<8x16xbf16>
    %c0_1 = arith.constant 0 : index
    %c0_2 = arith.constant 0 : index
    %2 = vector.load %arg2[%c0_1, %c0_2] : memref<16x128xbf16, #tpu.memory_space<vmem>>, vector<16x128xbf16>
    %cst = arith.constant dense<0.000000e+00> : vector<8x128xf32>
    %3 = tpu.matmul %1, %2, %cst {dimension_numbers = #tpu.dot_dimension_numbers<[1], [0], [0], [1], [0, 0, 1, 1], [], []>} : vector<8x16xbf16>, vector<16x128xbf16>, vector<8x128xf32> -> vector<8x128xf32>
    %c0_3 = arith.constant 0 : index
    %c0_4 = arith.constant 0 : index
    %4 = vector.load %arg3[%c0_3, %c0_4] : memref<1x128xf32, #tpu.memory_space<vmem>>, vector<1x128xf32>
    %5 = vector.broadcast %4 : vector<1x128xf32> to vector<8x128xf32>
    %6 = arith.addf %3, %5 : vector<8x128xf32>
    %cst_5 = arith.constant 0.000000e+00 : f32
    %7 = vector.broadcast %cst_5 : f32 to vector<8x128xf32>
    %8 = arith.maximumf %6, %7 : vector<8x128xf32>
    %9 = arith.truncf %8 : vector<8x128xf32> to vector<8x128xbf16>
    %c0_6 = arith.constant 0 : index
    %c0_7 = arith.constant 0 : index
    %10 = vector.load %arg4[%c0_6, %c0_7] : memref<128x4xbf16, #tpu.memory_space<vmem>>, vector<128x4xbf16>
    %cst_8 = arith.constant dense<0.000000e+00> : vector<8x4xf32>
    %11 = tpu.matmul %9, %10, %cst_8 {dimension_numbers = #tpu.dot_dimension_numbers<[1], [0], [0], [1], [0, 0, 1, 1], [], []>} : vector<8x128xbf16>, vector<128x4xbf16>, vector<8x4xf32> -> vector<8x4xf32>
    %c0_9 = arith.constant 0 : index
    %c0_10 = arith.constant 0 : index
    %12 = vector.load %arg5[%c0_9, %c0_10] : memref<1x4xf32, #tpu.memory_space<vmem>>, vector<1x4xf32>
    %13 = vector.broadcast %12 : vector<1x4xf32> to vector<8x4xf32>
    %14 = arith.addf %11, %13 : vector<8x4xf32>
    %c0_11 = arith.constant 0 : index
    %c0_12 = arith.constant 0 : index
    %15 = vector.load %arg6[%c0_11, %c0_12] : memref<8x4xf32, #tpu.memory_space<vmem>>, vector<8x4xf32>
    tpu.vector_store %arg6[%c0_11, %c0_12], %14 {strides = array<i32>} : memref<8x4xf32, #tpu.memory_space<vmem>>, vector<8x4xf32>,
    return
  }
  func.func @transform_0(%arg0: i32) -> (i32, i32) {
    %c0_i32 = arith.constant 0 : i32
    %c0_i32_0 = arith.constant 0 : i32
    return %arg0, %c0_i32 : i32, i32
  }
  func.func @transform_1(%arg0: i32) -> (i32, i32) {
    %c0_i32 = arith.constant 0 : i32
    %c0_i32_0 = arith.constant 0 : i32
    %c0_i32_1 = arith.constant 0 : i32
    return %c0_i32, %c0_i32_0 : i32, i32
  }
  func.func @transform_2(%arg0: i32) -> (i32, i32) {
    %c0_i32 = arith.constant 0 : i32
    %c0_i32_0 = arith.constant 0 : i32
    %c0_i32_1 = arith.constant 0 : i32
    return %c0_i32, %c0_i32_0 : i32, i32
  }
  func.func @transform_3(%arg0: i32) -> (i32, i32) {
    %c0_i32 = arith.constant 0 : i32
    %c0_i32_0 = arith.constant 0 : i32
    %c0_i32_1 = arith.constant 0 : i32
    return %c0_i32, %c0_i32_0 : i32, i32
  }
  func.func @transform_4(%arg0: i32) -> (i32, i32) {
    %c0_i32 = arith.constant 0 : i32
    %c0_i32_0 = arith.constant 0 : i32
    %c0_i32_1 = arith.constant 0 : i32
    return %c0_i32, %c0_i32_0 : i32, i32
  }
  func.func @transform_5(%arg0: i32) -> (i32, i32) {
    %c0_i32 = arith.constant 0 : i32
    %c0_i32_0 = arith.constant 0 : i32
    return %arg0, %c0_i32 : i32, i32
  }
}

</mosaic_0001>

<llo_original>
// kernel: qnet_forward.1
$region0: #{qnet_forward.1}
  #allocation0 [shape = 'u32[]', space=smem, size = 0x4, offset = 0x4, fixed_abs, tag = 'smem constant byte address 0x4 - core index']
  #allocation1 [shape = 'u32[144,128]{1,0:T(1,128)}', space=vmem, size = 0x12000, scoped, tag = 'internal scratch']
  %s0 = inlined_call_operand.vmem [shape: f32[8,16], index: 0, kind: input, shape index: {}]
  %s1 = inlined_call_operand.vmem [shape: bf16[16,128], index: 1, kind: input, shape index: {}]
  %s2 = inlined_call_operand.vmem [shape: f32[1,128], index: 2, kind: input, shape index: {}]
  %s3 = inlined_call_operand.vmem [shape: bf16[128,4], index: 3, kind: input, shape index: {}]
  %s4 = inlined_call_operand.vmem [shape: f32[1,4], index: 4, kind: input, shape index: {}]
  %s5 = inlined_call_operand.vmem [shape: f32[8,4], index: 5, kind: output, shape index: {}]
  %s6 = sld [smem:[#allocation0]]
  $region30: #{qnet_forward.1} parent=0
    _
  %s8 = ssub.s32 1, %s6
  %s9 = scalar_select 0, %s8, %s6
  // Predicated region
  $region2: #{qnet_forward.1} parent=0 // pred_check
    _
  $region3: #{qnet_forward.1} parent=0 // pred_check_branch
    %11 = sbr.rel (0) target = $region5
  $region4: #{qnet_forward.1} parent=0 // pred_region
    _
  $region5: #{qnet_forward.1} parent=0 // pred_fallthru
    _
  // Predicated region
  $region6: #{qnet_forward.1} parent=0 // pred_check
    _
  $region7: #{qnet_forward.1} parent=0 // pred_check_branch
    %13 = sbr.rel (0) target = $region9
  $region8: #{qnet_forward.1} parent=0 // pred_region
    _
  $region9: #{qnet_forward.1} parent=0 // pred_fallthru
    _
  // Predicated region
  $region10: #{qnet_forward.1} parent=0 // pred_check
    _
  $region11: #{qnet_forward.1} parent=0 // pred_check_branch
    %15 = sbr.rel (0) target = $region13
  $region12: #{qnet_forward.1} parent=0 // pred_region
    _
  $region13: #{qnet_forward.1} parent=0 // pred_fallthru
    _
  // Predicated region
  $region14: #{qnet_forward.1} parent=0 // pred_check
    _
  $region15: #{qnet_forward.1} parent=0 // pred_check_branch
    %17 = sbr.rel (0) target = $region17
  $region16: #{qnet_forward.1} parent=0 // pred_region
    _
  $region17: #{qnet_forward.1} parent=0 // pred_fallthru
    _
  // Predicated region
  $region18: #{qnet_forward.1} parent=0 // pred_check
    _
  $region19: #{qnet_forward.1} parent=0 // pred_check_branch
    %19 = sbr.rel (0) target = $region21
  $region20: #{qnet_forward.1} parent=0 // pred_region
    _
  $region21: #{qnet_forward.1} parent=0 // pred_fallthru
    _
  %v21 = vld [vmem:[%s0] sm:$0xff]
  %v22 = vpack.c.bf16 %v21, %v21
  %v23 = vld [vmem:[%s1] sm:$0xf]
  %v24 = vld [vmem:[%s1 + $0x4] sm:$0xf]
  %v25 = vld [vmem:[%s2] sm:$0x1]
  %v27 = vlaneseq
  %v28 = vshrl.u32 %v27, 7
  %v29 = vsub.s32 0, %v28
  %v30 = vrot.slane %v25, %v29
  %v34 = vunpack.c.l.b16 %v23
  %v35 = vunpack.c.l.b16 %v24
  %v36 = vpack.c.b16 %v35, %v34
  %vm38 = vcmask 130048
  %v40 = vsel %vm38, %v22, 0
  %42 = vmatprep.subr.bf16.mxu0 0
  %43 = vmatpush1.bf16.msra.mxu0 %v36
  %44 = vmatprep.subr.bf16.mxu0 0
  %45 = vmatpush1.bf16.msra.mxu0 0
  %46 = vmatprep.subr.bf16.mxu0 0
  %47 = vmatpush1.bf16.msra.mxu0 0
  %48 = vmatprep.subr.bf16.mxu0 0
  %49 = vmatpush1.bf16.msra.mxu0 0
  %50 = vmatprep.subr.bf16.mxu0 0
  %51 = vmatpush1.bf16.msra.mxu0 0
  %52 = vmatprep.subr.bf16.mxu0 0
  %53 = vmatpush1.bf16.msra.mxu0 0
  %54 = vmatprep.subr.bf16.mxu0 0
  %55 = vmatpush1.bf16.msra.mxu0 0
  %56 = vmatprep.subr.bf16.mxu0 0
  %57 = vmatpush1.bf16.msra.mxu0 0
  %58 = vmatprep.subr.bf16.mxu0 0
  %59 = vmatpush1.bf16.msra.mxu0 0
  %60 = vmatprep.subr.bf16.mxu0 0
  %61 = vmatpush1.bf16.msra.mxu0 0
  %62 = vmatprep.subr.bf16.mxu0 0
  %63 = vmatpush1.bf16.msra.mxu0 0
  %64 = vmatprep.subr.bf16.mxu0 0
  %65 = vmatpush1.bf16.msra.mxu0 0
  %66 = vmatprep.subr.bf16.mxu0 0
  %67 = vmatpush1.bf16.msra.mxu0 0
  %68 = vmatprep.subr.bf16.mxu0 0
  %69 = vmatpush1.bf16.msra.mxu0 0
  %70 = vmatprep.subr.bf16.mxu0 0
  %71 = vmatpush1.bf16.msra.mxu0 0
  %72 = vmatprep.subr.bf16.mxu0 0
  %73 = vmatpush1.bf16.msra.mxu0 0
  %74 = vmatprep.mubr.bf16.mxu0 0
  %75 = vmatmul.mubr.bf16.gmra.mrb[0].mxu0 %v40
  %v76 = vpop.f32.mrb[0].mxu0
  %v77 = vadd.f32 %v30, %v76
  %v78 = vpop.f32.mrb[0].mxu0
  %v79 = vpop.f32.mrb[0].mxu0
  %v80 = vpop.f32.mrb[0].mxu0
  %81 = vdwg.mxu0
  %v82 = vmax.f32 %v77, 0.0
  %v83 = vpack.c.bf16 %v82, %v82
  %v84 = vld [vmem:[%s3] sm:$0xf]
  %v85 = vld [vmem:[%s3 + $0x4] sm:$0xf]
  %v86 = vld [vmem:[%s3 + $0x8] sm:$0xf]
  %v87 = vld [vmem:[%s3 + $0xc] sm:$0xf]
  %v88 = vld [vmem:[%s3 + $0x10] sm:$0xf]
  %v89 = vld [vmem:[%s3 + $0x14] sm:$0xf]
  %v90 = vld [vmem:[%s3 + $0x18] sm:$0xf]
  %v91 = vld [vmem:[%s3 + $0x1c] sm:$0xf]
  %v92 = vld [vmem:[%s3 + $0x20] sm:$0xf]
  %v93 = vld [vmem:[%s3 + $0x24] sm:$0xf]
  %v94 = vld [vmem:[%s3 + $0x28] sm:$0xf]
  %v95 = vld [vmem:[%s3 + $0x2c] sm:$0xf]
  %v96 = vld [vmem:[%s3 + $0x30] sm:$0xf]
  %v97 = vld [vmem:[%s3 + $0x34] sm:$0xf]
  %v98 = vld [vmem:[%s3 + $0x38] sm:$0xf]
  %v99 = vld [vmem:[%s3 + $0x3c] sm:$0xf]
  %v100 = vld [vmem:[%s4] sm:$0x1]
  %v102 = vlaneseq
  %v103 = vshrl.u32 %v102, 7
  %v104 = vsub.s32 0, %v103
  %v105 = vrot.slane %v100, %v104
  %v123 = vunpack.c.l.b16 %v84
  %v124 = vunpack.c.l.b16 %v85
  %v125 = vunpack.c.l.b16 %v86
  %v126 = vunpack.c.l.b16 %v87
  %v127 = vunpack.c.l.b16 %v88
  %v128 = vunpack.c.l.b16 %v89
  %v129 = vunpack.c.l.b16 %v90
  %v130 = vunpack.c.l.b16 %v91
  %v131 = vunpack.c.l.b16 %v92
  %v132 = vunpack.c.l.b16 %v93
  %v133 = vunpack.c.l.b16 %v94
  %v134 = vunpack.c.l.b16 %v95
  %v135 = vunpack.c.l.b16 %v96
  %v136 = vunpack.c.l.b16 %v97
  %v137 = vunpack.c.l.b16 %v98
  %v138 = vunpack.c.l.b16 %v99
  %v139 = vpack.c.b16 %v124, %v123
  %v140 = vpack.c.b16 %v126, %v125
  %v141 = vpack.c.b16 %v128, %v127
  %v142 = vpack.c.b16 %v130, %v129
  %v143 = vpack.c.b16 %v132, %v131
  %v144 = vpack.c.b16 %v134, %v133
  %v145 = vpack.c.b16 %v136, %v135
  %v146 = vpack.c.b16 %v138, %v137
  %155 = vmatprep.subr.bf16.mxu0 0
  %156 = vmatpush1.bf16.msra.mxu0 %v139
  %157 = vmatprep.subr.bf16.mxu0 0
  %158 = vmatpush1.bf16.msra.mxu0 %v140
  %159 = vmatprep.subr.bf16.mxu0 0
  %160 = vmatpush1.bf16.msra.mxu0 %v141
  %161 = vmatprep.subr.bf16.mxu0 0
  %162 = vmatpush1.bf16.msra.mxu0 %v142
  %163 = vmatprep.subr.bf16.mxu0 0
  %164 = vmatpush1.bf16.msra.mxu0 %v143
  %165 = vmatprep.subr.bf16.mxu0 0
  %166 = vmatpush1.bf16.msra.mxu0 %v144
  %167 = vmatprep.subr.bf16.mxu0 0
  %168 = vmatpush1.bf16.msra.mxu0 %v145
  %169 = vmatprep.subr.bf16.mxu0 0
  %170 = vmatpush1.bf16.msra.mxu0 %v146
  %171 = vmatprep.subr.bf16.mxu0 0
  %172 = vmatpush1.bf16.msra.mxu0 0
  %173 = vmatprep.subr.bf16.mxu0 0
  %174 = vmatpush1.bf16.msra.mxu0 0
  %175 = vmatprep.subr.bf16.mxu0 0
  %176 = vmatpush1.bf16.msra.mxu0 0
  %177 = vmatprep.subr.bf16.mxu0 0
  %178 = vmatpush1.bf16.msra.mxu0 0
  %179 = vmatprep.subr.bf16.mxu0 0
  %180 = vmatpush1.bf16.msra.mxu0 0
  %181 = vmatprep.subr.bf16.mxu0 0
  %182 = vmatpush1.bf16.msra.mxu0 0
  %183 = vmatprep.subr.bf16.mxu0 0
  %184 = vmatpush1.bf16.msra.mxu0 0
  %185 = vmatprep.subr.bf16.mxu0 0
  %186 = vmatpush1.bf16.msra.mxu0 0
  %187 = vmatprep.mubr.bf16.mxu0 0
  %188 = vmatmul.mubr.bf16.gmra.mrb[0].mxu0 %v83
  %v189 = vpop.f32.mrb[0].mxu0
  %v190 = vadd.f32 %v105, %v189
  %v191 = vpop.f32.mrb[0].mxu0
  %v192 = vpop.f32.mrb[0].mxu0
  %v193 = vpop.f32.mrb[0].mxu0
  %194 = vdwg.mxu0
  %vm195 = vcmask 31744
  %196 = vst.msk [vmem:[%s5] sm:$0xff] %vm195, %v190
  // Predicated region
  $region22: #{qnet_forward.1} parent=0 // pred_check
    _
  $region23: #{qnet_forward.1} parent=0 // pred_check_branch
    %198 = sbr.rel (0) target = $region25
  $region24: #{qnet_forward.1} parent=0 // pred_region
    _
  $region25: #{qnet_forward.1} parent=0 // pred_fallthru
    _
  // Predicated region
  $region26: #{qnet_forward.1} parent=0 // pred_check
    _
  $region27: #{qnet_forward.1} parent=0 // pred_check_branch
    %200 = sbr.rel (0) target = $region29
  $region28: #{qnet_forward.1} parent=0 // pred_region
    _
  $region29: #{qnet_forward.1} parent=0 // pred_fallthru
    _

</llo_original>
